<compile_context>
chip_gen: v7x
topology: tpu7x:2x2x1
jax: 0.10.0
libtpu: 0.0.40
codegen_flags: <defaults>
</compile_context>

<pallas_src>
import jax
import jax.numpy as jnp
from jax.experimental import pallas as pl
from jax.experimental.pallas import tpu as pltpu

LANES = 128
MAX_SPATIAL_TILE = 2048  # lanes per block; ~C1*TS*4 bytes per input buffer


def bifpn_add3_kernel(wn_ref, x0_ref, x1_ref, x2_ref, cw_ref, cb_ref, o_ref):
    """Fused weighted-sum + SiLU + 1x1-conv for one (batch, spatial-tile) block.

    wn_ref : SMEM (3,)  f32    normalized fusion weights (scalar prefetch)
    x*_ref : VMEM (1, C1, TS)  input feature-map tiles
    cw_ref : VMEM (C2, C1)     1x1 conv weight
    cb_ref : VMEM (C2, 1)      conv bias
    o_ref  : VMEM (1, C2, TS)  output tile (written exactly once)
    """
    fused = (wn_ref[0] * x0_ref[0].astype(jnp.float32)
             + wn_ref[1] * x1_ref[0].astype(jnp.float32)
             + wn_ref[2] * x2_ref[0].astype(jnp.float32))
    # SiLU: x * sigmoid(x) == x / (1 + exp(-x))  (exp on the EUP slot)
    act = fused / (1.0 + jnp.exp(-fused))
    # 1x1 conv over channels as an MXU matmul: (C2, C1) @ (C1, TS)
    out = jnp.dot(cw_ref[...].astype(jnp.float32), act,
                  preferred_element_type=jnp.float32)
    out = out + cb_ref[...]                         # bias broadcast (C2, 1)
    o_ref[0] = out.astype(o_ref.dtype)


def _spatial_tile(hw):
    """Pad H*W to a multiple of 128 lanes and pick the largest tile (<=2048)
    that divides it, so there are no partial blocks."""
    hw_p = ((hw + LANES - 1) // LANES) * LANES
    for ts in (2048, 1024, 512, 256, 128):
        if ts <= MAX_SPATIAL_TILE and hw_p % ts == 0:
            return hw_p, ts
    return hw_p, LANES


def bifpn_add3(x_list, w, conv_w, conv_b, epsilon=1e-4):
    """JAX/Pallas equivalent of BiFPN_Add3.forward(x_list)."""
    assert len(x_list) == 3
    N, C1, H, W = x_list[0].shape
    C2 = conv_w.shape[0]
    dtype = x_list[0].dtype
    HW = H * W
    HWp, TS = _spatial_tile(HW)

    # Free reshapes of contiguous NCHW maps; the three maps are NOT stacked.
    xs = [xi.reshape(N, C1, HW) for xi in x_list]
    if HWp != HW:  # rare: only when H*W is not already a multiple of 128
        xs = [jnp.pad(xi, ((0, 0), (0, 0), (0, HWp - HW))) for xi in xs]

    # Parameter glue (O(3) scalar work): weight = w / (sum(w) + eps).
    w = w.astype(jnp.float32)
    wn = w / (jnp.sum(w) + jnp.float32(epsilon))

    cw = conv_w.reshape(C2, C1).astype(jnp.float32)
    cb = conv_b.reshape(C2, 1).astype(jnp.float32)

    grid = (N, HWp // TS)
    dsize = jnp.dtype(dtype).itemsize
    cost = pl.CostEstimate(
        flops=int(N * HWp * (8 * C1 + 2 * C1 * C2 + C2)),
        transcendentals=int(N * C1 * HWp),
        bytes_accessed=int((3 * C1 * dsize + C2 * dsize) * N * HWp
                           + (C2 * C1 + C2 + 3) * 4),
    )

    out = pl.pallas_call(
        bifpn_add3_kernel,
        out_shape=jax.ShapeDtypeStruct((N, C2, HWp), dtype),
        grid_spec=pltpu.PrefetchScalarGridSpec(
            num_scalar_prefetch=1,
            grid=grid,
            in_specs=[
                pl.BlockSpec((1, C1, TS), lambda n, s, wn_ref: (n, 0, s)),
                pl.BlockSpec((1, C1, TS), lambda n, s, wn_ref: (n, 0, s)),
                pl.BlockSpec((1, C1, TS), lambda n, s, wn_ref: (n, 0, s)),
                pl.BlockSpec((C2, C1), lambda n, s, wn_ref: (0, 0)),
                pl.BlockSpec((C2, 1), lambda n, s, wn_ref: (0, 0)),
            ],
            out_specs=pl.BlockSpec((1, C2, TS), lambda n, s, wn_ref: (n, 0, s)),
        ),
        compiler_params=pltpu.CompilerParams(
            dimension_semantics=("parallel", "parallel")),
        cost_estimate=cost,
    )(wn, xs[0], xs[1], xs[2], cw, cb)

    return out[:, :, :HW].reshape(N, C2, H, W)


def bifpn_add3_reference(x_list, w, conv_w, conv_b, epsilon=1e-4):
    """Pure-JAX reference mirroring the PyTorch forward exactly."""
    w = w.astype(jnp.float32)
    wn = w / (jnp.sum(w) + jnp.float32(epsilon))
    fused = (wn[0] * x_list[0].astype(jnp.float32)
             + wn[1] * x_list[1].astype(jnp.float32)
             + wn[2] * x_list[2].astype(jnp.float32))
    act = jax.nn.silu(fused)
    cw = conv_w.reshape(conv_w.shape[0], -1).astype(jnp.float32)
    out = jnp.einsum("oc,nchw->nohw", cw, act,
                     precision=jax.lax.Precision.HIGHEST)
    out = out + conv_b.astype(jnp.float32)[None, :, None, None]
    return out.astype(x_list[0].dtype)


if __name__ == "__main__":
    key = jax.random.PRNGKey(0)
    N, C1, C2, H, W = 2, 8, 16, 16, 16      # small NCHW feature maps, c1 != c2
    k1, k2, k3, k4, k5 = jax.random.split(key, 5)

    x_list = [jax.random.normal(k, (N, C1, H, W), dtype=jnp.float32)
              for k in (k1, k2, k3)]

    # Parameters: nn.Parameter(torch.ones(3)) plus a deterministic 1x1 conv.
    w = jnp.ones((3,), dtype=jnp.float32)
    bound = 1.0 / (C1 ** 0.5)               # PyTorch Conv2d default init range
    conv_w = jax.random.uniform(k4, (C2, C1, 1, 1), jnp.float32, -bound, bound)
    conv_b = jax.random.uniform(k5, (C2,), jnp.float32, -bound, bound)

    out = bifpn_add3(x_list, w, conv_w, conv_b)
    out = jax.block_until_ready(out)

    ref = bifpn_add3_reference(x_list, w, conv_w, conv_b)
    assert out.shape == (N, C2, H, W)
    assert jnp.allclose(out, ref, atol=1e-4, rtol=1e-4), "mismatch vs reference"

    print("KERNEL_OK")
</pallas_src>

<mosaic_0001>
module attributes {stable_mosaic.version = 11 : i64} {
  func.func @bifpn_add3_kernel(%arg0: i32, %arg1: i32, %arg2: memref<3xf32, #tpu.memory_space<smem>>, %arg3: memref<1x8x256xf32, #tpu.memory_space<vmem>>, %arg4: memref<1x8x256xf32, #tpu.memory_space<vmem>>, %arg5: memref<1x8x256xf32, #tpu.memory_space<vmem>>, %arg6: memref<16x8xf32, #tpu.memory_space<vmem>>, %arg7: memref<16x1xf32, #tpu.memory_space<vmem>>, %arg8: memref<1x16x256xf32, #tpu.memory_space<vmem>>) attributes {dimension_semantics = [#tpu.dimension_semantics<parallel>, #tpu.dimension_semantics<parallel>], iteration_bounds = array<i64: 2, 1>, scalar_prefetch = 1 : i64, scratch_operands = 0 : i64, tpu.core_type = #tpu.core_type<tc>, window_params = [{transform_indices = @transform_0, window_bounds = array<i64: 1, 8, 256>}, {transform_indices = @transform_1, window_bounds = array<i64: 1, 8, 256>}, {transform_indices = @transform_2, window_bounds = array<i64: 1, 8, 256>}, {pipeline_mode = #tpu.pipeline_mode<synchronous>, transform_indices = @transform_3, window_bounds = array<i64: 16, 8>}, {pipeline_mode = #tpu.pipeline_mode<synchronous>, transform_indices = @transform_4, window_bounds = array<i64: 16, 1>}, {transform_indices = @transform_5, window_bounds = array<i64: 1, 16, 256>}]} {
    %c0 = arith.constant 0 : index
    %0 = memref.load %arg2[%c0] : memref<3xf32, #tpu.memory_space<smem>>
    %c0_0 = arith.constant 0 : index
    %c0_1 = arith.constant 0 : index
    %c0_2 = arith.constant 0 : index
    %1 = vector.load %arg3[%c0_0, %c0_1, %c0_2] : memref<1x8x256xf32, #tpu.memory_space<vmem>>, vector<1x8x256xf32>
    %2 = vector.shape_cast %1 : vector<1x8x256xf32> to vector<8x256xf32>
    %3 = vector.broadcast %0 : f32 to vector<8x256xf32>
    %4 = arith.mulf %3, %2 : vector<8x256xf32>
    %c1 = arith.constant 1 : index
    %5 = memref.load %arg2[%c1] : memref<3xf32, #tpu.memory_space<smem>>
    %c0_3 = arith.constant 0 : index
    %c0_4 = arith.constant 0 : index
    %c0_5 = arith.constant 0 : index
    %6 = vector.load %arg4[%c0_3, %c0_4, %c0_5] : memref<1x8x256xf32, #tpu.memory_space<vmem>>, vector<1x8x256xf32>
    %7 = vector.shape_cast %6 : vector<1x8x256xf32> to vector<8x256xf32>
    %8 = vector.broadcast %5 : f32 to vector<8x256xf32>
    %9 = arith.mulf %8, %7 : vector<8x256xf32>
    %10 = arith.addf %4, %9 : vector<8x256xf32>
    %c2 = arith.constant 2 : index
    %11 = memref.load %arg2[%c2] : memref<3xf32, #tpu.memory_space<smem>>
    %c0_6 = arith.constant 0 : index
    %c0_7 = arith.constant 0 : index
    %c0_8 = arith.constant 0 : index
    %12 = vector.load %arg5[%c0_6, %c0_7, %c0_8] : memref<1x8x256xf32, #tpu.memory_space<vmem>>, vector<1x8x256xf32>
    %13 = vector.shape_cast %12 : vector<1x8x256xf32> to vector<8x256xf32>
    %14 = vector.broadcast %11 : f32 to vector<8x256xf32>
    %15 = arith.mulf %14, %13 : vector<8x256xf32>
    %16 = arith.addf %10, %15 : vector<8x256xf32>
    %cst = arith.constant 0.000000e+00 : f32
    %17 = vector.broadcast %cst : f32 to vector<8x256xf32>
    %18 = arith.subf %17, %16 : vector<8x256xf32>
    %19 = math.exp %18 : vector<8x256xf32>
    %cst_9 = arith.constant 1.000000e+00 : f32
    %20 = vector.broadcast %cst_9 : f32 to vector<8x256xf32>
    %21 = arith.addf %20, %19 : vector<8x256xf32>
    %22 = arith.divf %16, %21 : vector<8x256xf32>
    %c0_10 = arith.constant 0 : index
    %c0_11 = arith.constant 0 : index
    %23 = vector.load %arg6[%c0_10, %c0_11] : memref<16x8xf32, #tpu.memory_space<vmem>>, vector<16x8xf32>
    %cst_12 = arith.constant dense<0.000000e+00> : vector<16x256xf32>
    %24 = tpu.matmul %23, %22, %cst_12 {dimension_numbers = #tpu.dot_dimension_numbers<[1], [0], [0], [1], [0, 0, 1, 1], [], []>} : vector<16x8xf32>, vector<8x256xf32>, vector<16x256xf32> -> vector<16x256xf32>
    %c0_13 = arith.constant 0 : index
    %c0_14 = arith.constant 0 : index
    %25 = vector.load %arg7[%c0_13, %c0_14] : memref<16x1xf32, #tpu.memory_space<vmem>>, vector<16x1xf32>
    %26 = vector.broadcast %25 : vector<16x1xf32> to vector<16x256xf32>
    %27 = arith.addf %24, %26 : vector<16x256xf32>
    %c0_15 = arith.constant 0 : index
    %c0_16 = arith.constant 0 : index
    %c0_17 = arith.constant 0 : index
    %28 = vector.load %arg8[%c0_15, %c0_16, %c0_17] : memref<1x16x256xf32, #tpu.memory_space<vmem>>, vector<1x16x256xf32>
    %29 = vector.shape_cast %28 : vector<1x16x256xf32> to vector<16x256xf32>
    %30 = vector.shape_cast %27 : vector<16x256xf32> to vector<1x16x256xf32>
    tpu.vector_store %arg8[%c0_15, %c0_16, %c0_17], %30 {strides = array<i32>} : memref<1x16x256xf32, #tpu.memory_space<vmem>>, vector<1x16x256xf32>,
    return
  }
  func.func @transform_0(%arg0: i32, %arg1: i32, %arg2: memref<3xf32, #tpu.memory_space<smem>>) -> (i32, i32, i32) {
    %c0_i32 = arith.constant 0 : i32
    %c0_i32_0 = arith.constant 0 : i32
    return %arg0, %c0_i32, %arg1 : i32, i32, i32
  }
  func.func @transform_1(%arg0: i32, %arg1: i32, %arg2: memref<3xf32, #tpu.memory_space<smem>>) -> (i32, i32, i32) {
    %c0_i32 = arith.constant 0 : i32
    %c0_i32_0 = arith.constant 0 : i32
    return %arg0, %c0_i32, %arg1 : i32, i32, i32
  }
  func.func @transform_2(%arg0: i32, %arg1: i32, %arg2: memref<3xf32, #tpu.memory_space<smem>>) -> (i32, i32, i32) {
    %c0_i32 = arith.constant 0 : i32
    %c0_i32_0 = arith.constant 0 : i32
    return %arg0, %c0_i32, %arg1 : i32, i32, i32
  }
  func.func @transform_3(%arg0: i32, %arg1: i32, %arg2: memref<3xf32, #tpu.memory_space<smem>>) -> (i32, i32) {
    %c0_i32 = arith.constant 0 : i32
    %c0_i32_0 = arith.constant 0 : i32
    %c0_i32_1 = arith.constant 0 : i32
    return %c0_i32, %c0_i32_0 : i32, i32
  }
  func.func @transform_4(%arg0: i32, %arg1: i32, %arg2: memref<3xf32, #tpu.memory_space<smem>>) -> (i32, i32) {
    %c0_i32 = arith.constant 0 : i32
    %c0_i32_0 = arith.constant 0 : i32
    %c0_i32_1 = arith.constant 0 : i32
    return %c0_i32, %c0_i32_0 : i32, i32
  }
  func.func @transform_5(%arg0: i32, %arg1: i32, %arg2: memref<3xf32, #tpu.memory_space<smem>>) -> (i32, i32, i32) {
    %c0_i32 = arith.constant 0 : i32
    %c0_i32_0 = arith.constant 0 : i32
    return %arg0, %c0_i32, %arg1 : i32, i32, i32
  }
}

</mosaic_0001>

<llo_original>
// kernel: tpu_custom_call.1
$region0: #{tpu_custom_call.1}
  #allocation0 [shape = 'u32[]', space=smem, size = 0x4, offset = 0x4, fixed_abs, tag = 'smem constant byte address 0x4 - core index']
  #allocation1 [shape = 'u32[144,128]{1,0:T(1,128)}', space=vmem, size = 0x12000, scoped, tag = 'internal scratch']
  #allocation2 [shape = 's32[1]{0}', space=sflag, size = 0x4, scoped, tag = 'scoped memory for tpu_custom_call.1']
  #allocation3 [shape = 'u8[512]{0}', space=smem, size = 0x200, scoped, tag = 'prefetched SMEM operand 0']
  %s0 = inlined_call_operand.vmem [shape: f32[3], index: 0, kind: input, shape index: {}]
  %s1 = inlined_call_operand.vmem [shape: f32[2,8,256], index: 1, kind: input, shape index: {}]
  %s2 = inlined_call_operand.hbm [shape: f32[2,8,256], index: 2, kind: input, shape index: {}]
  %s3 = inlined_call_operand.hbm [shape: f32[2,8,256], index: 3, kind: input, shape index: {}]
  %s4 = inlined_call_operand.vmem [shape: f32[16,8], index: 4, kind: input, shape index: {}]
  %s5 = inlined_call_operand.vmem [shape: f32[16,1], index: 5, kind: input, shape index: {}]
  %s6 = inlined_call_operand.hbm [shape: f32[2,16,256], index: 6, kind: output, shape index: {}]
  %s7 = sld [smem:[#allocation0]]
  $region61: #{tpu_custom_call.1} parent=0
    _
  %s9 = ssub.s32 1, %s7
  %s10 = scalar_select 0, %s9, %s7
  %s11 = sshll.u32 %s0, 4
  %s12 = int_to_ptr.vmem [resolvable:$true] %s11
  %14 = dma.vmem_to_smem %s12, 16, [#allocation3], [#allocation2]
  %15 = dma.done [#allocation2], 16
  %16 = sfence
  $region1: #{tpu_custom_call.1} parent=0
    #allocation4 [shape = 'u8[16384]{0}', space=vmem, size = 0x4000, scoped, tag = 'input window, operand 2']
    #allocation5 [shape = 's32[2]{0}', space=sflag, size = 0x8, scoped, tag = 'scoped memory for tpu_custom_call.1']
    #allocation6 [shape = 's32[2]{0}', space=sflag, size = 0x8, scoped, tag = 'scoped memory for tpu_custom_call.1']
    #allocation7 [shape = 'u8[16384]{0}', space=vmem, size = 0x4000, scoped, tag = 'input window, operand 3']
    #allocation8 [shape = 's32[2]{0}', space=sflag, size = 0x8, scoped, tag = 'scoped memory for tpu_custom_call.1']
    #allocation9 [shape = 'u8[32768]{0}', space=vmem, size = 0x8000, scoped, tag = 'output window, operand 0']
    %17 = vsyncpa [#allocation5], 0
    %s18 = scalar_lea.sflag [#allocation5], 1
    %19 = vsyncpa %s18, 0
    %20 = vsyncpa [#allocation8], 0
    %s21 = scalar_lea.sflag [#allocation8], 1
    %22 = vsyncpa %s21, 0
    %23 = vsyncpa [#allocation6], 0
    %s24 = scalar_lea.sflag [#allocation6], 1
    %25 = vsyncpa %s24, 0
    loop: start=0, step=1, limit=4
    $region2: #{tpu_custom_call.1} parent=1 // loop_pre_header
      _
    $region3: #{tpu_custom_call.1} parent=1 // loop_header
      %s27 = sphi 0, %s31
      %p28 = scmp.ge.s32.totalorder %s27, 4
      %s34 = sphi 0, %s46
      %s35 = sphi 0, %s42
      %s36 = sphi 0, %s34
      %s37 = sphi 0, %s35
      %s38 = sphi 0, %s36
      %s39 = sphi 0, %s37
      %s51 = sphi 0, %s53
      %s54 = sphi 0, %s51
      %s55 = sphi 0, %s54
      %s71 = sphi 0, %s55
      %s79 = sphi 0, %s81
      %s82 = sphi 0, %s79
      %s83 = sphi 0, %s82
      %s99 = sphi 0, %s83
      %s107 = sphi 0, %s109
      %s110 = sphi 0, %s107
      %s111 = sphi 0, %s110
      %s127 = sphi 0, %s111
      %s131 = sphi 0, %s131
      %s133 = sphi 0, %s131
      %s134 = sphi 0, %s133
      %s148 = sphi 0, %s134
      %s152 = sphi 0, %s152
      %s154 = sphi 0, %s152
      %s155 = sphi 0, %s154
      %s169 = sphi 0, %s155
      %s177 = sphi 0, %s179
      %s180 = sphi 0, %s177
      %s181 = sphi 0, %s180
      %s197 = sphi 0, %s181
    $region4: #{tpu_custom_call.1} parent=1 // loop_header_branch
      %30 = sbr.rel (%p28) target = $region8
    $region5: #{tpu_custom_call.1} parent=1 // loop_body
      %s32 = ssub.s32 %s27, 1
      %s33 = ssub.s32 %s27, 2
      %s40 = sadd.s32 1, %s35
      %p41 = scmp.ge.s32.totalorder %s40, 1
      %s42 = scalar_select %p41, 0, %s40
      %s43 = sadd.s32 1, %s34
      %s44 = scalar_select %p41, %s43, %s34
      %p45 = scmp.ge.s32.totalorder %s44, 2
      %s46 = scalar_select %p45, 0, %s44
      %s47 = ssub.s32 %s34, %s46
      %s48 = ssub.s32 %s35, %s42
      %s49 = sor.u32 %s47, %s48
      %p50 = scmp.eq.s32.totalorder %s49, 0
      %s52 = sadd.s32 %s51, 1
      %s53 = scalar_select %p50, %s51, %s52
      %p56 = pneg %p50
      %p57 = scmp.eq.s32.totalorder %s27, 1
      %p58 = por %p56, %p57
      %p59 = scmp.ne.s32.totalorder %s51, %s54
      %p60 = scmp.eq.s32.totalorder %s27, 0
      %p61 = por %p59, %p60
      %p62 = scmp.ne.s32.totalorder %s51, %s54
      %p63 = scmp.eq.s32.totalorder %s32, 1
      %p64 = por %p62, %p63
      %p65 = scmp.ne.s32.totalorder %s54, %s55
      %p66 = scmp.eq.s32.totalorder %s32, 0
      %p67 = por %p65, %p66
      %p68 = scmp.ne.s32.totalorder %s54, %s55
      %p69 = scmp.eq.s32.totalorder %s33, 1
      %p70 = por %p68, %p69
      %p72 = scmp.ne.s32.totalorder %s55, %s71
      %p73 = scmp.eq.s32.totalorder %s33, 0
      %p74 = por %p72, %p73
      %s75 = ssub.s32 %s34, %s46
      %s76 = ssub.s32 %s35, %s42
      %s77 = sor.u32 %s75, %s76
      %p78 = scmp.eq.s32.totalorder %s77, 0
      %s80 = sadd.s32 %s79, 1
      %s81 = scalar_select %p78, %s79, %s80
      %p84 = pneg %p78
      %p85 = scmp.eq.s32.totalorder %s27, 1
      %p86 = por %p84, %p85
      %p87 = scmp.ne.s32.totalorder %s79, %s82
      %p88 = scmp.eq.s32.totalorder %s27, 0
      %p89 = por %p87, %p88
      %p90 = scmp.ne.s32.totalorder %s79, %s82
      %p91 = scmp.eq.s32.totalorder %s32, 1
      %p92 = por %p90, %p91
      %p93 = scmp.ne.s32.totalorder %s82, %s83
      %p94 = scmp.eq.s32.totalorder %s32, 0
      %p95 = por %p93, %p94
      %p96 = scmp.ne.s32.totalorder %s82, %s83
      %p97 = scmp.eq.s32.totalorder %s33, 1
      %p98 = por %p96, %p97
      %p100 = scmp.ne.s32.totalorder %s83, %s99
      %p101 = scmp.eq.s32.totalorder %s33, 0
      %p102 = por %p100, %p101
      %s103 = ssub.s32 %s34, %s46
      %s104 = ssub.s32 %s35, %s42
      %s105 = sor.u32 %s103, %s104
      %p106 = scmp.eq.s32.totalorder %s105, 0
      %s108 = sadd.s32 %s107, 1
      %s109 = scalar_select %p106, %s107, %s108
      %p112 = pneg %p106
      %p113 = scmp.eq.s32.totalorder %s27, 1
      %p114 = por %p112, %p113
      %p115 = scmp.ne.s32.totalorder %s107, %s110
      %p116 = scmp.eq.s32.totalorder %s27, 0
      %p117 = por %p115, %p116
      %p118 = scmp.ne.s32.totalorder %s107, %s110
      %p119 = scmp.eq.s32.totalorder %s32, 1
      %p120 = por %p118, %p119
      %p121 = scmp.ne.s32.totalorder %s110, %s111
      %p122 = scmp.eq.s32.totalorder %s32, 0
      %p123 = por %p121, %p122
      %p124 = scmp.ne.s32.totalorder %s110, %s111
      %p125 = scmp.eq.s32.totalorder %s33, 1
      %p126 = por %p124, %p125
      %p128 = scmp.ne.s32.totalorder %s111, %s127
      %p129 = scmp.eq.s32.totalorder %s33, 0
      %p130 = por %p128, %p129
      %s132 = sadd.s32 %s131, 1
      %p135 = scmp.eq.s32.totalorder %s27, 1
      %p136 = scmp.ne.s32.totalorder %s131, %s133
      %p137 = scmp.eq.s32.totalorder %s27, 0
      %p138 = por %p136, %p137
      %p139 = scmp.ne.s32.totalorder %s131, %s133
      %p140 = scmp.eq.s32.totalorder %s32, 1
      %p141 = por %p139, %p140
      %p142 = scmp.ne.s32.totalorder %s133, %s134
      %p143 = scmp.eq.s32.totalorder %s32, 0
      %p144 = por %p142, %p143
      %p145 = scmp.ne.s32.totalorder %s133, %s134
      %p146 = scmp.eq.s32.totalorder %s33, 1
      %p147 = por %p145, %p146
      %p149 = scmp.ne.s32.totalorder %s134, %s148
      %p150 = scmp.eq.s32.totalorder %s33, 0
      %p151 = por %p149, %p150
      %s153 = sadd.s32 %s152, 1
      %p156 = scmp.eq.s32.totalorder %s27, 1
      %p157 = scmp.ne.s32.totalorder %s152, %s154
      %p158 = scmp.eq.s32.totalorder %s27, 0
      %p159 = por %p157, %p158
      %p160 = scmp.ne.s32.totalorder %s152, %s154
      %p161 = scmp.eq.s32.totalorder %s32, 1
      %p162 = por %p160, %p161
      %p163 = scmp.ne.s32.totalorder %s154, %s155
      %p164 = scmp.eq.s32.totalorder %s32, 0
      %p165 = por %p163, %p164
      %p166 = scmp.ne.s32.totalorder %s154, %s155
      %p167 = scmp.eq.s32.totalorder %s33, 1
      %p168 = por %p166, %p167
      %p170 = scmp.ne.s32.totalorder %s155, %s169
      %p171 = scmp.eq.s32.totalorder %s33, 0
      %p172 = por %p170, %p171
      %s173 = ssub.s32 %s34, %s46
      %s174 = ssub.s32 %s35, %s42
      %s175 = sor.u32 %s173, %s174
      %p176 = scmp.eq.s32.totalorder %s175, 0
      %s178 = sadd.s32 %s177, 1
      %s179 = scalar_select %p176, %s177, %s178
      %p182 = pneg %p176
      %p183 = scmp.eq.s32.totalorder %s27, 1
      %p184 = por %p182, %p183
      %p185 = scmp.ne.s32.totalorder %s177, %s180
      %p186 = scmp.eq.s32.totalorder %s27, 0
      %p187 = por %p185, %p186
      %p188 = scmp.ne.s32.totalorder %s177, %s180
      %p189 = scmp.eq.s32.totalorder %s32, 1
      %p190 = por %p188, %p189
      %p191 = scmp.ne.s32.totalorder %s180, %s181
      %p192 = scmp.eq.s32.totalorder %s32, 0
      %p193 = por %p191, %p192
      %p194 = scmp.ne.s32.totalorder %s180, %s181
      %p195 = scmp.eq.s32.totalorder %s33, 1
      %p196 = por %p194, %p195
      %p198 = scmp.ne.s32.totalorder %s181, %s197
      %p199 = scmp.eq.s32.totalorder %s33, 0
      %p200 = por %p198, %p199
      %p201 = scmp.le.s32.totalorder 1, %s27
      %p202 = scmp.lt.s32.totalorder %s27, 3
      %p203 = pnand %p201, %p202
      %p204 = pneg %p203
      // Predicated region
      $region9: #{tpu_custom_call.1} parent=5 // pred_check
        _
      $region10: #{tpu_custom_call.1} parent=5 // pred_check_branch
        %206 = sbr.rel (%p203) target = $region12
      $region11: #{tpu_custom_call.1} parent=5 // pred_region
        %s207 = ssub.s32 %s27, 1
        // Predicated region
        $region13: #{tpu_custom_call.1} parent=11 // pred_check
          %p208 = pneg %p144
        $region14: #{tpu_custom_call.1} parent=11 // pred_check_branch
          %210 = sbr.rel (%p208) target = $region16
        $region15: #{tpu_custom_call.1} parent=11 // pred_region
          _
        $region16: #{tpu_custom_call.1} parent=11 // pred_fallthru
          _
        // Predicated region
        $region17: #{tpu_custom_call.1} parent=11 // pred_check
          %p211 = pneg %p165
        $region18: #{tpu_custom_call.1} parent=11 // pred_check_branch
          %213 = sbr.rel (%p211) target = $region20
        $region19: #{tpu_custom_call.1} parent=11 // pred_region
          _
        $region20: #{tpu_custom_call.1} parent=11 // pred_fallthru
          _
      $region12: #{tpu_custom_call.1} parent=5 // pred_fallthru
        _
      %p214 = scmp.lt.s32.totalorder %s27, 2
      // Predicated region
      $region21: #{tpu_custom_call.1} parent=5 // pred_check
        %p215 = pneg %p214
      $region22: #{tpu_custom_call.1} parent=5 // pred_check_branch
        %217 = sbr.rel (%p215) target = $region24
      $region23: #{tpu_custom_call.1} parent=5 // pred_region
        // Predicated region
        $region25: #{tpu_custom_call.1} parent=23 // pred_check
          %p218 = pneg %p61
        $region26: #{tpu_custom_call.1} parent=23 // pred_check_branch
          %220 = sbr.rel (%p218) target = $region28
        $region27: #{tpu_custom_call.1} parent=23 // pred_region
          %s221 = smul.u32 2, %s35
          %p222 = scmp.lt.s32.totalorder %s34, 1
          %s223 = scalar_select %p222, %s34, 1
          %p224 = scmp.lt.s32.totalorder %s221, 1
          %s225 = scalar_select %p224, %s221, 1
          %s226 = smul.addr %s223, 2
          %s227 = sadd.s32 %s225, %s226
          %s228 = smul.addr %s227, 8
          %s229 = scalar_lea.vmem %s1, %s228
          %s230 = smul.u32 2, %s35
        $region28: #{tpu_custom_call.1} parent=23 // pred_fallthru
          _
        // Predicated region
        $region29: #{tpu_custom_call.1} parent=23 // pred_check
          %p231 = pneg %p89
        $region30: #{tpu_custom_call.1} parent=23 // pred_check_branch
          %233 = sbr.rel (%p231) target = $region32
        $region31: #{tpu_custom_call.1} parent=23 // pred_region
          %s234 = sand.u32 %s79, 1
          %s235 = scalar_lea.sflag [#allocation5], %s234
          %s236 = sand.u32 %s79, 1
          %s237 = smul.addr %s236, 16
          %s238 = scalar_lea.vmem [#allocation4], %s237
          %s239 = smul.u32 2, %s35
          %s241 = ssub.s32 256, 256
          %242 = vsyncadd %s235, %s241
          %s243 = smul.addr %s34, 2
          %s244 = sadd.s32 %s239, %s243
          %s245 = smul.addr %s244, 128
          %s246 = scalar_lea.hbm %s2, %s245
          %s248 = sshll.u32 %s238, 4
          %s249 = int_to_ptr.vmem [resolvable:$true] %s248
          %251 = dma.hbm_to_vmem [thread:$0]  %s246, 256, %s249, %s235
        $region32: #{tpu_custom_call.1} parent=23 // pred_fallthru
          _
        // Predicated region
        $region33: #{tpu_custom_call.1} parent=23 // pred_check
          %p252 = pneg %p117
        $region34: #{tpu_custom_call.1} parent=23 // pred_check_branch
          %254 = sbr.rel (%p252) target = $region36
        $region35: #{tpu_custom_call.1} parent=23 // pred_region
          %s255 = sand.u32 %s107, 1
          %s256 = scalar_lea.sflag [#allocation8], %s255
          %s257 = sand.u32 %s107, 1
          %s258 = smul.addr %s257, 16
          %s259 = scalar_lea.vmem [#allocation7], %s258
          %s260 = smul.u32 2, %s35
          %s262 = ssub.s32 256, 256
          %263 = vsyncadd %s256, %s262
          %s264 = smul.addr %s34, 2
          %s265 = sadd.s32 %s260, %s264
          %s266 = smul.addr %s265, 128
          %s267 = scalar_lea.hbm %s3, %s266
          %s269 = sshll.u32 %s259, 4
          %s270 = int_to_ptr.vmem [resolvable:$true] %s269
          %272 = dma.hbm_to_vmem [thread:$0]  %s267, 256, %s270, %s256
        $region36: #{tpu_custom_call.1} parent=23 // pred_fallthru
          _
      $region24: #{tpu_custom_call.1} parent=5 // pred_fallthru
        _
      %p273 = scmp.le.s32.totalorder 1, %s27
      %p274 = scmp.lt.s32.totalorder %s27, 3
      %p275 = pnand %p273, %p274
      %p276 = pneg %p275
      // Predicated region
      $region37: #{tpu_custom_call.1} parent=5 // pred_check
        _
      $region38: #{tpu_custom_call.1} parent=5 // pred_check_branch
        %278 = sbr.rel (%p275) target = $region40
      $region39: #{tpu_custom_call.1} parent=5 // pred_region
        %s279 = ssub.s32 %s27, 1
        %s280 = sand.u32 %s82, 1
        %s281 = scalar_lea.sflag [#allocation5], %s280
        %s282 = sand.u32 %s82, 1
        %s283 = smul.addr %s282, 16
        %s284 = scalar_lea.vmem [#allocation4], %s283
        // Predicated region
        $region41: #{tpu_custom_call.1} parent=39 // pred_check
          %p285 = pneg %p95
        $region42: #{tpu_custom_call.1} parent=39 // pred_check_branch
          %287 = sbr.rel (%p285) target = $region44
        $region43: #{tpu_custom_call.1} parent=39 // pred_region
          %288 = dma.done %s281, 256
        $region44: #{tpu_custom_call.1} parent=39 // pred_fallthru
          _
        %s289 = sand.u32 %s110, 1
        %s290 = scalar_lea.sflag [#allocation8], %s289
        %s291 = sand.u32 %s110, 1
        %s292 = smul.addr %s291, 16
        %s293 = scalar_lea.vmem [#allocation7], %s292
        // Predicated region
        $region45: #{tpu_custom_call.1} parent=39 // pred_check
          %p294 = pneg %p123
        $region46: #{tpu_custom_call.1} parent=39 // pred_check_branch
          %296 = sbr.rel (%p294) target = $region48
        $region47: #{tpu_custom_call.1} parent=39 // pred_region
          %297 = dma.done %s290, 256
        $region48: #{tpu_custom_call.1} parent=39 // pred_fallthru
          _
        %s298 = smul.u32 2, %s37
        %p299 = scmp.lt.s32.totalorder %s36, 1
        %s300 = scalar_select %p299, %s36, 1
        %p301 = scmp.lt.s32.totalorder %s298, 1
        %s302 = scalar_select %p301, %s298, 1
        %s303 = smul.addr %s300, 2
        %s304 = sadd.s32 %s302, %s303
        %s305 = smul.addr %s304, 8
        %s306 = scalar_lea.vmem %s1, %s305
        %p307 = pneg %p67
        %p308 = pneg %p64
        %s309 = sand.u32 %s82, 1
        %s310 = scalar_lea.sflag [#allocation5], %s309
        %s311 = sand.u32 %s82, 1
        %s312 = smul.addr %s311, 16
        %s313 = scalar_lea.vmem [#allocation4], %s312
        %p314 = pneg %p95
        %p315 = pneg %p92
        %s316 = sand.u32 %s110, 1
        %s317 = scalar_lea.sflag [#allocation8], %s316
        %s318 = sand.u32 %s110, 1
        %s319 = smul.addr %s318, 16
        %s320 = scalar_lea.vmem [#allocation7], %s319
        %p321 = pneg %p123
        %p322 = pneg %p120
        %p323 = pneg %p144
        %p324 = pneg %p141
        %p325 = pneg %p165
        %p326 = pneg %p162
        %p327 = pneg %p193
        %p328 = pneg %p190
        %s329 = sand.u32 %s180, 1
        %s330 = scalar_lea.sflag [#allocation6], %s329
        %s331 = sand.u32 %s180, 1
        %s332 = smul.addr %s331, 32
        %s333 = scalar_lea.vmem [#allocation9], %s332
        %s334 = smul.u32 2, %s37
        %p335 = scmp.lt.s32.totalorder %s36, 1
        %s336 = scalar_select %p335, %s36, 1
        %p337 = scmp.lt.s32.totalorder %s334, 1
        %s338 = scalar_select %p337, %s334, 1
        %s339 = smul.addr %s336, 2
        %s340 = sadd.s32 %s338, %s339
        %s341 = smul.addr %s340, 8
        %s342 = scalar_lea.vmem %s1, %s341
        %s343 = smul.u32 2, %s37
        %s344 = smul.u32 2, %s37
        %s345 = smul.u32 2, %s37
        %s346 = smul.u32 2, %s37
        %s347 = sld [smem:[#allocation3]]
        %v348 = vld [vmem:[%s342] sm:$0xff]
        %v349 = vld [vmem:[%s342 + $0x8] sm:$0xff]
        %v350 = vstv %s347
        %v351 = vmul.f32 %v350, %v348
        %v352 = vmul.f32 %v350, %v349
        %s353 = sld [smem:[#allocation3 + $0x1]]
        %v354 = vld [vmem:[%s284] sm:$0xff]
        %v355 = vld [vmem:[%s284 + $0x8] sm:$0xff]
        %v356 = vstv %s353
        %v357 = vmul.f32 %v356, %v354
        %v358 = vmul.f32 %v356, %v355
        %v359 = vadd.f32 %v351, %v357
        %v360 = vadd.f32 %v352, %v358
        %s361 = sld [smem:[#allocation3 + $0x2]]
        %v362 = vld [vmem:[%s293] sm:$0xff]
        %v363 = vld [vmem:[%s293 + $0x8] sm:$0xff]
        %v364 = vstv %s361
        %v365 = vmul.f32 %v364, %v362
        %v366 = vmul.f32 %v364, %v363
        %v367 = vadd.f32 %v359, %v365
        %v368 = vadd.f32 %v360, %v366
        %v369 = vsub.f32 0.0, %v367
        %v370 = vsub.f32 0.0, %v368
        %v371 = vmul.f32 %v369, 1.442695
        %v372 = vpow.pop %v371
        %v373 = vmul.f32 %v370, 1.442695
        %v374 = vpow.pop %v373
        %v375 = vadd.f32 %v372, 1.0
        %v376 = vadd.f32 %v374, 1.0
        %v377 = vrcp.pop %v375
        %v378 = vmul.f32 %v367, %v377
        %v379 = vrcp.pop %v376
        %v380 = vmul.f32 %v368, %v379
        %v381 = vld [vmem:[%s4] sm:$0xff]
        %v382 = vld [vmem:[%s4 + $0x8] sm:$0xff]
        %v383 = vld [vmem:[%s5] sm:$0xff]
        %v384 = vld [vmem:[%s5 + $0x8] sm:$0xff]
        %386 = vset.pattern.permute.xlu0 0
        %387 = vperm.xlu0 %386, %v383
        %v388 = vpop.permute.xlu0 %387
        %391 = vset.pattern.permute.xlu0 0
        %392 = vperm.xlu0 %391, %v384
        %v393 = vpop.permute.xlu0 %392
        %vm395 = vcmask 64512
        %v397 = vsel %vm395, %v381, 0
        %v400 = vsel %vm395, %v382, 0
        %402 = vmatprep.subr.mxu0 %v380
        %403 = vmatpush1.msra.mxu0 %v378
        %404 = vmatprep.subr.mxu0 0.0
        %405 = vmatpush1.msra.mxu0 0.0
        %406 = vmatprep.subr.mxu0 0.0
        %407 = vmatpush1.msra.mxu0 0.0
        %408 = vmatprep.subr.mxu0 0.0
        %409 = vmatpush1.msra.mxu0 0.0
        %410 = vmatprep.subr.mxu0 0.0
        %411 = vmatpush1.msra.mxu0 0.0
        %412 = vmatprep.subr.mxu0 0.0
        %413 = vmatpush1.msra.mxu0 0.0
        %414 = vmatprep.subr.mxu0 0.0
        %415 = vmatpush1.msra.mxu0 0.0
        %416 = vmatprep.subr.mxu0 0.0
        %417 = vmatpush1.msra.mxu0 0.0
        %418 = vmatprep.subr.mxu0 0.0
        %419 = vmatpush1.msra.mxu0 0.0
        %420 = vmatprep.subr.mxu0 0.0
        %421 = vmatpush1.msra.mxu0 0.0
        %422 = vmatprep.subr.mxu0 0.0
        %423 = vmatpush1.msra.mxu0 0.0
        %424 = vmatprep.subr.mxu0 0.0
        %425 = vmatpush1.msra.mxu0 0.0
        %426 = vmatprep.subr.mxu0 0.0
        %427 = vmatpush1.msra.mxu0 0.0
        %428 = vmatprep.subr.mxu0 0.0
        %429 = vmatpush1.msra.mxu0 0.0
        %430 = vmatprep.subr.mxu0 0.0
        %431 = vmatpush1.msra.mxu0 0.0
        %432 = vmatprep.subr.mxu0 0.0
        %433 = vmatpush1.msra.mxu0 0.0
        %434 = vmatprep.subr.mxu0 0.0
        %435 = vmatpush1.msra.mxu0 0.0
        %436 = vmatprep.subr.mxu0 0.0
        %437 = vmatpush1.msra.mxu0 0.0
        %438 = vmatprep.subr.mxu0 0.0
        %439 = vmatpush1.msra.mxu0 0.0
        %440 = vmatprep.subr.mxu0 0.0
        %441 = vmatpush1.msra.mxu0 0.0
        %442 = vmatprep.subr.mxu0 0.0
        %443 = vmatpush1.msra.mxu0 0.0
        %444 = vmatprep.subr.mxu0 0.0
        %445 = vmatpush1.msra.mxu0 0.0
        %446 = vmatprep.subr.mxu0 0.0
        %447 = vmatpush1.msra.mxu0 0.0
        %448 = vmatprep.subr.mxu0 0.0
        %449 = vmatpush1.msra.mxu0 0.0
        %450 = vmatprep.subr.mxu0 0.0
        %451 = vmatpush1.msra.mxu0 0.0
        %452 = vmatprep.subr.mxu0 0.0
        %453 = vmatpush1.msra.mxu0 0.0
        %454 = vmatprep.subr.mxu0 0.0
        %455 = vmatpush1.msra.mxu0 0.0
        %456 = vmatprep.subr.mxu0 0.0
        %457 = vmatpush1.msra.mxu0 0.0
        %458 = vmatprep.subr.mxu0 0.0
        %459 = vmatpush1.msra.mxu0 0.0
        %460 = vmatprep.subr.mxu0 0.0
        %461 = vmatpush1.msra.mxu0 0.0
        %462 = vmatprep.subr.mxu0 0.0
        %463 = vmatpush1.msra.mxu0 0.0
        %464 = vmatprep.subr.mxu0 0.0
        %465 = vmatpush1.msra.mxu0 0.0
        %466 = vmatprep.mubr.f32.mxu0 0.0
        %467 = vmatmul.mubr.f32.gmra.mrb[0].mxu0 %v397
        %v468 = vpop.f32.mrb[0].mxu0
        %v469 = vadd.f32 %v388, %v468
        %v470 = vpop.f32.mrb[0].mxu0
        %v471 = vadd.f32 %v388, %v470
        %472 = vmatprep.mubr.f32.mxu0 0.0
        %473 = vmatmul.mubr.f32.gmra.mrb[0].mxu0 %v400
        %v474 = vpop.f32.mrb[0].mxu0
        %v475 = vadd.f32 %v393, %v474
        %v476 = vpop.f32.mrb[0].mxu0
        %v477 = vadd.f32 %v393, %v476
        %478 = vdwg.mxu0
        %479 = vst [vmem:[%s333] sm:$0xff] %v469
        %480 = vst [vmem:[%s333 + $0x8] sm:$0xff] %v471
        %481 = vst [vmem:[%s333 + $0x10] sm:$0xff] %v475
        %482 = vst [vmem:[%s333 + $0x18] sm:$0xff] %v477
        %s483 = sand.u32 %s180, 1
        %s484 = scalar_lea.sflag [#allocation6], %s483
        %s485 = sand.u32 %s180, 1
        %s486 = smul.addr %s485, 32
        %s487 = scalar_lea.vmem [#allocation9], %s486
        // Predicated region
        $region49: #{tpu_custom_call.1} parent=39 // pred_check
          %p488 = pneg %p190
        $region50: #{tpu_custom_call.1} parent=39 // pred_check_branch
          %490 = sbr.rel (%p488) target = $region52
        $region51: #{tpu_custom_call.1} parent=39 // pred_region
          %s491 = smul.u32 2, %s37
          %s493 = ssub.s32 512, 512
          %494 = vsyncadd %s484, %s493
          %s495 = smul.addr %s36, 4
          %s496 = sadd.s32 %s491, %s495
          %s497 = smul.addr %s496, 128
          %s498 = scalar_lea.hbm %s6, %s497
          %s499 = sshll.u32 %s487, 4
          %s500 = int_to_ptr.vmem [resolvable:$true] %s499
          %505 = dma.vmem_to_hbm [thread:$0]  %s500, 512, %s498, %s484, 256, 256, 16
        $region52: #{tpu_custom_call.1} parent=39 // pred_fallthru
          _
      $region40: #{tpu_custom_call.1} parent=5 // pred_fallthru
        _
      %p506 = scmp.le.s32.totalorder 2, %s27
      // Predicated region
      $region53: #{tpu_custom_call.1} parent=5 // pred_check
        %p507 = pneg %p506
      $region54: #{tpu_custom_call.1} parent=5 // pred_check_branch
        %509 = sbr.rel (%p507) target = $region56
      $region55: #{tpu_custom_call.1} parent=5 // pred_region
        %s510 = ssub.s32 %s27, 2
        // Predicated region
        $region57: #{tpu_custom_call.1} parent=55 // pred_check
          %p511 = pneg %p196
        $region58: #{tpu_custom_call.1} parent=55 // pred_check_branch
          %513 = sbr.rel (%p511) target = $region60
        $region59: #{tpu_custom_call.1} parent=55 // pred_region
          %s514 = sand.u32 %s181, 1
          %s515 = scalar_lea.sflag [#allocation6], %s514
          %s516 = sand.u32 %s181, 1
          %s517 = smul.addr %s516, 32
          %s518 = scalar_lea.vmem [#allocation9], %s517
          %519 = dma.done %s515, 512
        $region60: #{tpu_custom_call.1} parent=55 // pred_fallthru
          _
      $region56: #{tpu_custom_call.1} parent=5 // pred_fallthru
        _
    $region6: #{tpu_custom_call.1} parent=1 // loop_footer
      %s31 = sadd.s32 1, %s27
    $region7: #{tpu_custom_call.1} parent=1 // loop_footer_branch
      %26 = sbr.rel target = $region3
    $region8: #{tpu_custom_call.1} parent=1 // loop_exit
      _
    %520 = vsyncpa [#allocation5], 1
    %s521 = scalar_lea.sflag [#allocation5], 1
    %522 = vsyncpa %s521, 1
    %523 = vsyncpa [#allocation8], 1
    %s524 = scalar_lea.sflag [#allocation8], 1
    %525 = vsyncpa %s524, 1
    %526 = vsyncpa [#allocation6], 1
    %s527 = scalar_lea.sflag [#allocation6], 1
    %528 = vsyncpa %s527, 1

</llo_original>
